<compile_context>
chip_gen: v5e
topology: v5e:2x2
jax: 0.10.0
libtpu: 0.0.40
codegen_flags: <defaults>
</compile_context>

<pallas_src>
import functools

import numpy as np
import jax
import jax.numpy as jnp
from jax import lax
from jax.experimental import pallas as pl
from jax.experimental.pallas import tpu as pltpu


def _round_up(x, m):
    return ((x + m - 1) // m) * m


# ----------------------------------------------------------------------------
# Kernel 1: encoder layer + per-sentence mean pooling.
#   x block : (SB*S, H) bf16 token embeddings for SB sentences (sentence-major)
#   w       : (H, H) bf16, b: (1, H) f32
#   out     : (SB, H) f32  == hidden_states[-2].mean(dim=1) per sentence
# ----------------------------------------------------------------------------
def encode_pool_kernel(x_ref, w_ref, b_ref, o_ref, *, sb, seq):
    h = jnp.dot(x_ref[...], w_ref[...], preferred_element_type=jnp.float32)
    h = jnp.tanh(h + b_ref[...])                        # f32 elementwise (v5e-safe)
    hh = h.reshape(sb, seq, h.shape[-1])
    o_ref[...] = jnp.sum(hh, axis=1) * (1.0 / seq)      # constant mul, not divide


def encode_and_pool(x_flat, w1, b1, n_pad, seq, sb):
    _, hdim = x_flat.shape
    grid = (n_pad // sb,)

    # VMEM estimate (2 pipeline buffers per streamed operand); only raise the
    # scoped limit when the default 32 MiB would be exceeded.
    blk_x = sb * seq * hdim * 2
    blk_w = hdim * hdim * 2
    blk_o = sb * hdim * 4
    est = 2 * (blk_x + blk_w + blk_o) + 2 * hdim * 4 + (1 << 20)
    cp = dict(dimension_semantics=("parallel",))
    if est > (32 << 20):
        cp["vmem_limit_bytes"] = int(min(2 * est, 64 << 20))
    # TODO(synk): at very large H, tile w1 along the output dim (2nd grid axis)
    # or single-buffer it so 2x(H,H) bf16 does not dominate v7x's 64 MiB VMEM.

    kernel = functools.partial(encode_pool_kernel, sb=sb, seq=seq)
    return pl.pallas_call(
        kernel,
        out_shape=jax.ShapeDtypeStruct((n_pad, hdim), jnp.float32),
        grid=grid,
        in_specs=[
            pl.BlockSpec((sb * seq, hdim), lambda i: (i, 0)),
            pl.BlockSpec((hdim, hdim), lambda i: (0, 0)),
            pl.BlockSpec((1, hdim), lambda i: (0, 0)),
        ],
        out_specs=pl.BlockSpec((sb, hdim), lambda i: (i, 0)),
        compiler_params=pltpu.CompilerParams(**cp),
    )(x_flat, w1, b1)


# ----------------------------------------------------------------------------
# Kernel 2: fused KMeans (Lloyd iterations) + greedy nearest-unused selection.
#   Resident input: xt (H, Np) bf16 only.  Distances (kp, Np) are lane-dense
#   and never leave VMEM; output = (nlist,) int32 indices in SMEM.
# ----------------------------------------------------------------------------
def kmeans_select_kernel(xt_ref, sel_ref, *, k, kp, n, np_, iters):
    BIG = 1e30
    xt = xt_ref[...]                                    # (H, Np) bf16, resident
    xtf = xt.astype(jnp.float32)
    x2 = jnp.sum(xtf * xtf, axis=0, keepdims=True)      # (1, Np) f32, once

    row_k = lax.broadcasted_iota(jnp.int32, (kp, np_), 0)
    col_n = lax.broadcasted_iota(jnp.int32, (kp, np_), 1)
    col1 = lax.broadcasted_iota(jnp.int32, (1, np_), 1)
    valid_col = col_n < n                               # mask lane padding

    def sqdist(c):                                      # c (kp,H) f32 -> (kp,Np)
        c2 = jnp.sum(c * c, axis=1, keepdims=True)
        cx = jnp.dot(c.astype(jnp.bfloat16), xt,
                     preferred_element_type=jnp.float32)
        d = jnp.maximum(c2 - 2.0 * cx + x2, 0.0)
        return jnp.where(row_k < k, d, BIG)             # mask sublane padding

    def pts_matmul(assign_bf16):                        # (kp,Np)·(H,Np)^T -> (kp,H)
        return lax.dot_general(assign_bf16, xt, (((1,), (1,)), ((), ())),
                               preferred_element_type=jnp.float32)

    # Init = first k points (copied via a one-hot matmul; no in-kernel transpose).
    # TODO(synk): sklearn's seeded k-means++ init is not reproduced bit-exactly.
    init_assign = ((row_k == col_n) & (row_k < k)).astype(jnp.bfloat16)
    c0 = pts_matmul(init_assign)                        # (kp, H) f32

    def lloyd(_, c):
        d = sqdist(c)                                   # (kp, Np)
        dmin = jnp.min(d, axis=0, keepdims=True)        # (1, Np)
        first = jnp.min(jnp.where(d <= dmin, row_k, kp), axis=0, keepdims=True)
        assign = (row_k == first) & valid_col           # exactly one True / real col
        counts = jnp.sum(assign.astype(jnp.float32), axis=1, keepdims=True)
        sums = pts_matmul(assign.astype(jnp.bfloat16))  # bf16 MXU, f32 acc
        new_c = sums / jnp.maximum(counts, 1.0)
        return jnp.where(counts > 0.0, new_c, c)        # empty cluster keeps centroid

    c_fin = lax.fori_loop(0, iters, lloyd, c0, unroll=True)

    # Greedy nearest-unused-point per centroid (ClusterBase.__call__ semantics).
    d_fin = sqdist(c_fin)                               # (kp, Np)
    penalty = jnp.where(col1 < n, 0.0, BIG)             # exclude padded columns
    for j in range(k):                                  # k small & static -> unrolled
        dj = d_fin[j:j + 1, :] + penalty                # static row slice
        mn = jnp.min(dj, axis=1, keepdims=True)
        idx = jnp.min(jnp.where(dj <= mn, col1, np_), axis=1, keepdims=True)
        sel_ref[j] = idx[0, 0]
        penalty = jnp.where(col1 == idx, BIG, penalty)  # mark point as used


def kmeans_select(emb, nlist, iters=10):
    n, hdim = emb.shape
    np_ = max(_round_up(n, 128), 128)                   # lane-pad N
    kp = max(_round_up(nlist, 8), 8)                    # sublane-pad k
    # One fused XLA pass over emb: pad + transpose + bf16 cast -> (H, Np).
    xt = jnp.pad(emb, ((0, np_ - n), (0, 0))).T.astype(jnp.bfloat16)

    xt_bytes = hdim * np_ * 2
    cp = dict(dimension_semantics=("arbitrary",))
    if 4 * xt_bytes > (32 << 20):
        cp["vmem_limit_bytes"] = int(min(6 * xt_bytes, 64 << 20))
    # TODO(synk): for corpora where (H, Np) bf16 exceeds VMEM (v7x: 64 MiB),
    # tile the assignment step over an inner N axis (pltpu.emit_pipeline) and
    # accumulate partial sums/counts instead of full residency.

    kernel = functools.partial(kmeans_select_kernel, k=nlist, kp=kp, n=n,
                               np_=np_, iters=iters)
    return pl.pallas_call(
        kernel,
        out_shape=jax.ShapeDtypeStruct((nlist,), jnp.int32),
        grid=(1,),
        in_specs=[pl.BlockSpec((hdim, np_), lambda i: (0, 0))],
        out_specs=pl.BlockSpec(memory_space=pltpu.MemorySpace.SMEM),
        compiler_params=pltpu.CompilerParams(**cp),
    )(xt)


# ----------------------------------------------------------------------------
# ClusterBase.__call__ semantics: only nlist scalars reach the host.
# ----------------------------------------------------------------------------
def cluster_select(embeddings, topk=None, ratio=0.2, use_first=True, iters=10):
    n = embeddings.shape[0]
    nlist = min(topk, n) if topk is not None else max(int(n * ratio), 1)
    sel = np.asarray(kmeans_select(embeddings, nlist, iters=iters))
    hidden_args = sorted(int(i) for i in sel)
    if use_first and hidden_args[0] != 0:
        hidden_args.insert(0, 0)
    return jnp.asarray(hidden_args, dtype=jnp.int32)


# ----------------------------------------------------------------------------
# Compressor.forward  (pooling='mean', hidden_layer=-2, cluster='kmeans')
# ----------------------------------------------------------------------------
def compressor_forward(input_ids, params, topk=None, return_clustered_ids=True,
                       kmeans_iters=10):
    emb_table, w1, b1 = params["emb"], params["w1"], params["b1"]
    n_sent, seq = input_ids.shape

    # Sentence block: target >= ~512 sublane rows per streamed x block, padded
    # to a multiple of 8 sentences (no single-step fallback).
    sb = max(8, _round_up(-(-512 // seq), 8))
    sb = min(sb, _round_up(n_sent, 8))
    n_pad = _round_up(n_sent, sb)

    ids = input_ids
    if n_pad != n_sent:
        ids = jnp.pad(input_ids, ((0, n_pad - n_sent), (0, 0)))

    # bf16 table -> the gather emits bf16 directly (no extra cast pass).
    # TODO(synk): fusing this gather into kernel 1 (scalar-prefetched ids +
    # per-row DMA from the table in pl.ANY) would remove the x_flat HBM
    # round trip entirely.
    x_flat = jnp.take(emb_table, ids.reshape(-1), axis=0)          # (n_pad*S, H) bf16
    emb_all = encode_and_pool(x_flat, w1, b1, n_pad, seq, sb)      # (n_pad, H) f32
    embeddings = emb_all[:n_sent]                                  # drop pad sentences

    # TODO(synk): 'max' / 'median' pooling variants not implemented (default 'mean').
    topk_values = cluster_select(embeddings, topk=topk, iters=kmeans_iters)
    output = {"topk": topk_values, "embeddings": embeddings[topk_values]}
    if return_clustered_ids:
        output["input_ids"] = input_ids[topk_values]
    return output


if __name__ == "__main__":
    key = jax.random.PRNGKey(0)
    k_ids, k_emb, k_w1, k_b1 = jax.random.split(key, 4)

    N_SENT, SEQ, HIDDEN, VOCAB = 16, 16, 128, 128      # lane-aligned H
    input_ids = jax.random.randint(k_ids, (N_SENT, SEQ), 0, VOCAB, dtype=jnp.int32)

    params = {
        "emb": (jax.random.normal(k_emb, (VOCAB, HIDDEN), jnp.float32) * 0.1
                ).astype(jnp.bfloat16),
        "w1": (jax.random.normal(k_w1, (HIDDEN, HIDDEN), jnp.float32) * 0.1
               ).astype(jnp.bfloat16),
        "b1": jax.random.normal(k_b1, (1, HIDDEN), jnp.float32) * 0.01,
    }

    out = compressor_forward(input_ids, params, topk=4, return_clustered_ids=True)
    jax.block_until_ready(out["embeddings"])
    jax.block_until_ready(out["topk"])

    assert out["embeddings"].shape[1] == HIDDEN
    assert out["input_ids"].shape[1] == SEQ
    assert out["topk"].shape[0] == out["embeddings"].shape[0]
    assert int(jnp.max(out["topk"])) < N_SENT
    print("KERNEL_OK")
</pallas_src>

<mosaic_0001>
module attributes {stable_mosaic.version = 11 : i64} {
  func.func @encode_pool_kernel(%arg0: i32, %arg1: memref<256x128xbf16, #tpu.memory_space<vmem>>, %arg2: memref<128x128xbf16, #tpu.memory_space<vmem>>, %arg3: memref<1x128xf32, #tpu.memory_space<vmem>>, %arg4: memref<16x128xf32, #tpu.memory_space<vmem>>) attributes {dimension_semantics = [#tpu.dimension_semantics<parallel>], iteration_bounds = array<i64: 1>, scalar_prefetch = 0 : i64, scratch_operands = 0 : i64, tpu.core_type = #tpu.core_type<tc>, window_params = [{transform_indices = @transform_0, window_bounds = array<i64: 256, 128>}, {pipeline_mode = #tpu.pipeline_mode<synchronous>, transform_indices = @transform_1, window_bounds = array<i64: 128, 128>}, {pipeline_mode = #tpu.pipeline_mode<synchronous>, transform_indices = @transform_2, window_bounds = array<i64: 1, 128>}, {transform_indices = @transform_3, window_bounds = array<i64: 16, 128>}]} {
    %c0 = arith.constant 0 : index
    %c0_0 = arith.constant 0 : index
    %0 = vector.load %arg1[%c0, %c0_0] : memref<256x128xbf16, #tpu.memory_space<vmem>>, vector<256x128xbf16>
    %c0_1 = arith.constant 0 : index
    %c0_2 = arith.constant 0 : index
    %1 = vector.load %arg2[%c0_1, %c0_2] : memref<128x128xbf16, #tpu.memory_space<vmem>>, vector<128x128xbf16>
    %cst = arith.constant dense<0.000000e+00> : vector<256x128xf32>
    %2 = tpu.matmul %0, %1, %cst {dimension_numbers = #tpu.dot_dimension_numbers<[1], [0], [0], [1], [0, 0, 1, 1], [], []>} : vector<256x128xbf16>, vector<128x128xbf16>, vector<256x128xf32> -> vector<256x128xf32>
    %c0_3 = arith.constant 0 : index
    %c0_4 = arith.constant 0 : index
    %3 = vector.load %arg3[%c0_3, %c0_4] : memref<1x128xf32, #tpu.memory_space<vmem>>, vector<1x128xf32>
    %4 = vector.broadcast %3 : vector<1x128xf32> to vector<256x128xf32>
    %5 = arith.addf %2, %4 : vector<256x128xf32>
    %6 = math.tanh %5 : vector<256x128xf32>
    %7 = vector.shape_cast %6 : vector<256x128xf32> to vector<16x16x128xf32>
    %cst_5 = arith.constant dense<0.000000e+00> : vector<16x128xf32>
    %8 = vector.multi_reduction <add>, %7, %cst_5 [1] : vector<16x16x128xf32> to vector<16x128xf32>
    %cst_6 = arith.constant 6.250000e-02 : f32
    %9 = vector.broadcast %cst_6 : f32 to vector<16x128xf32>
    %10 = arith.mulf %8, %9 : vector<16x128xf32>
    %c0_7 = arith.constant 0 : index
    %c0_8 = arith.constant 0 : index
    %11 = vector.load %arg4[%c0_7, %c0_8] : memref<16x128xf32, #tpu.memory_space<vmem>>, vector<16x128xf32>
    tpu.vector_store %arg4[%c0_7, %c0_8], %10 {strides = array<i32>} : memref<16x128xf32, #tpu.memory_space<vmem>>, vector<16x128xf32>,
    return
  }
  func.func @transform_0(%arg0: i32) -> (i32, i32) {
    %c0_i32 = arith.constant 0 : i32
    %c0_i32_0 = arith.constant 0 : i32
    return %arg0, %c0_i32 : i32, i32
  }
  func.func @transform_1(%arg0: i32) -> (i32, i32) {
    %c0_i32 = arith.constant 0 : i32
    %c0_i32_0 = arith.constant 0 : i32
    %c0_i32_1 = arith.constant 0 : i32
    return %c0_i32, %c0_i32_0 : i32, i32
  }
  func.func @transform_2(%arg0: i32) -> (i32, i32) {
    %c0_i32 = arith.constant 0 : i32
    %c0_i32_0 = arith.constant 0 : i32
    %c0_i32_1 = arith.constant 0 : i32
    return %c0_i32, %c0_i32_0 : i32, i32
  }
  func.func @transform_3(%arg0: i32) -> (i32, i32) {
    %c0_i32 = arith.constant 0 : i32
    %c0_i32_0 = arith.constant 0 : i32
    return %arg0, %c0_i32 : i32, i32
  }
}

</mosaic_0001>

<llo_original>
// kernel: tpu_custom_call.1
$region0: #{tpu_custom_call.1}
  #allocation0 [shape = 'u32[]', space=smem, size = 0x4, offset = 0x4, fixed_abs, tag = 'smem constant byte address 0x4 - core index']
  #allocation1 [shape = 'u32[72,128]{1,0:T(1,128)}', space=vmem, size = 0x9000, scoped, tag = 'internal scratch']
  %s0 = inlined_call_operand.hbm [shape: bf16[256,128], index: 0, kind: input, shape index: {}]
  %s1 = inlined_call_operand.hbm [shape: bf16[128,128], index: 1, kind: input, shape index: {}]
  %s2 = inlined_call_operand.vmem [shape: f32[1,128], index: 2, kind: input, shape index: {}]
  %s3 = inlined_call_operand.hbm [shape: f32[16,128], index: 3, kind: output, shape index: {}]
  %s4 = sld [smem:[#allocation0]]
  $region30: #{tpu_custom_call.1} parent=0
    _
  %s6 = ssub.s32 1, %s4
  %s7 = scalar_select 0, %s6, %s4
  $region1: #{tpu_custom_call.1} parent=0
    #allocation2 [shape = 'u8[65536]{0}', space=vmem, size = 0x10000, scoped, tag = 'input window, operand 0, single buffered']
    #allocation3 [shape = 's32[1]{0}', space=sflag, size = 0x4, scoped, tag = 'scoped memory for tpu_custom_call.1']
    #allocation4 [shape = 's32[1]{0}', space=sflag, size = 0x4, scoped, tag = 'scoped memory for tpu_custom_call.1']
    #allocation5 [shape = 'u8[32768]{0}', space=vmem, size = 0x8000, scoped, tag = 'input window, operand 1, single buffered']
    #allocation6 [shape = 's32[1]{0}', space=sflag, size = 0x4, scoped, tag = 'scoped memory for tpu_custom_call.1']
    #allocation7 [shape = 'u8[8192]{0}', space=vmem, size = 0x2000, scoped, tag = 'output window, operand 0, single buffered']
    %8 = vsyncpa [#allocation3], 0
    %9 = vsyncpa [#allocation6], 0
    %10 = vsyncpa [#allocation4], 0
    // Predicated region
    $region2: #{tpu_custom_call.1} parent=1 // pred_check
      _
    $region3: #{tpu_custom_call.1} parent=1 // pred_check_branch
      %12 = sbr.rel (0) target = $region5
    $region4: #{tpu_custom_call.1} parent=1 // pred_region
      %14 = vsyncadd [#allocation3], 0
      %s15 = sshll.u32 %s0, 4
      %s16 = int_to_ptr.hbm [resolvable:$true] %s15
      %s17 = sshll.u32 [#allocation2], 4
      %s18 = int_to_ptr.vmem [resolvable:$true] %s17
      %23 = dma.hbm_to_vmem [thread:$0]  %s16, 2048, %s18, [#allocation3], 64, 64, 4
    $region5: #{tpu_custom_call.1} parent=1 // pred_fallthru
      _
    // Predicated region
    $region6: #{tpu_custom_call.1} parent=1 // pred_check
      _
    $region7: #{tpu_custom_call.1} parent=1 // pred_check_branch
      %25 = sbr.rel (0) target = $region9
    $region8: #{tpu_custom_call.1} parent=1 // pred_region
      %27 = vsyncadd [#allocation6], 0
      %s28 = sshll.u32 %s1, 4
      %s29 = int_to_ptr.hbm [resolvable:$true] %s28
      %s30 = sshll.u32 [#allocation5], 4
      %s31 = int_to_ptr.vmem [resolvable:$true] %s30
      %36 = dma.hbm_to_vmem [thread:$0]  %s29, 1024, %s31, [#allocation6], 64, 64, 4
    $region9: #{tpu_custom_call.1} parent=1 // pred_fallthru
      _
    // Predicated region
    $region10: #{tpu_custom_call.1} parent=1 // pred_check
      _
    $region11: #{tpu_custom_call.1} parent=1 // pred_check_branch
      %38 = sbr.rel (0) target = $region13
    $region12: #{tpu_custom_call.1} parent=1 // pred_region
      _
    $region13: #{tpu_custom_call.1} parent=1 // pred_fallthru
      _
    // Predicated region
    $region14: #{tpu_custom_call.1} parent=1 // pred_check
      _
    $region15: #{tpu_custom_call.1} parent=1 // pred_check_branch
      %40 = sbr.rel (0) target = $region17
    $region16: #{tpu_custom_call.1} parent=1 // pred_region
      %42 = dma.done [#allocation3], 2048
    $region17: #{tpu_custom_call.1} parent=1 // pred_fallthru
      _
    // Predicated region
    $region18: #{tpu_custom_call.1} parent=1 // pred_check
      _
    $region19: #{tpu_custom_call.1} parent=1 // pred_check_branch
      %44 = sbr.rel (0) target = $region21
    $region20: #{tpu_custom_call.1} parent=1 // pred_region
      %46 = dma.done [#allocation6], 1024
    $region21: #{tpu_custom_call.1} parent=1 // pred_fallthru
      _
    %v47 = vld [vmem:[#allocation2] sm:$0xf]
    %v48 = vld [vmem:[#allocation2 + $0x4] sm:$0xf]
    %v49 = vld [vmem:[#allocation2 + $0x8] sm:$0xf]
    %v50 = vld [vmem:[#allocation2 + $0xc] sm:$0xf]
    %v51 = vld [vmem:[#allocation2 + $0x10] sm:$0xf]
    %v52 = vld [vmem:[#allocation2 + $0x14] sm:$0xf]
    %v53 = vld [vmem:[#allocation2 + $0x18] sm:$0xf]
    %v54 = vld [vmem:[#allocation2 + $0x1c] sm:$0xf]
    %v55 = vld [vmem:[#allocation2 + $0x20] sm:$0xf]
    %v56 = vld [vmem:[#allocation2 + $0x24] sm:$0xf]
    %v57 = vld [vmem:[#allocation2 + $0x28] sm:$0xf]
    %v58 = vld [vmem:[#allocation2 + $0x2c] sm:$0xf]
    %v59 = vld [vmem:[#allocation2 + $0x30] sm:$0xf]
    %v60 = vld [vmem:[#allocation2 + $0x34] sm:$0xf]
    %v61 = vld [vmem:[#allocation2 + $0x38] sm:$0xf]
    %v62 = vld [vmem:[#allocation2 + $0x3c] sm:$0xf]
    %v63 = vld [vmem:[#allocation2 + $0x40] sm:$0xf]
    %v64 = vld [vmem:[#allocation2 + $0x44] sm:$0xf]
    %v65 = vld [vmem:[#allocation2 + $0x48] sm:$0xf]
    %v66 = vld [vmem:[#allocation2 + $0x4c] sm:$0xf]
    %v67 = vld [vmem:[#allocation2 + $0x50] sm:$0xf]
    %v68 = vld [vmem:[#allocation2 + $0x54] sm:$0xf]
    %v69 = vld [vmem:[#allocation2 + $0x58] sm:$0xf]
    %v70 = vld [vmem:[#allocation2 + $0x5c] sm:$0xf]
    %v71 = vld [vmem:[#allocation2 + $0x60] sm:$0xf]
    %v72 = vld [vmem:[#allocation2 + $0x64] sm:$0xf]
    %v73 = vld [vmem:[#allocation2 + $0x68] sm:$0xf]
    %v74 = vld [vmem:[#allocation2 + $0x6c] sm:$0xf]
    %v75 = vld [vmem:[#allocation2 + $0x70] sm:$0xf]
    %v76 = vld [vmem:[#allocation2 + $0x74] sm:$0xf]
    %v77 = vld [vmem:[#allocation2 + $0x78] sm:$0xf]
    %v78 = vld [vmem:[#allocation2 + $0x7c] sm:$0xf]
    %v79 = vld [vmem:[#allocation5] sm:$0xf]
    %v80 = vld [vmem:[#allocation5 + $0x4] sm:$0xf]
    %v81 = vld [vmem:[#allocation5 + $0x8] sm:$0xf]
    %v82 = vld [vmem:[#allocation5 + $0xc] sm:$0xf]
    %v83 = vld [vmem:[#allocation5 + $0x10] sm:$0xf]
    %v84 = vld [vmem:[#allocation5 + $0x14] sm:$0xf]
    %v85 = vld [vmem:[#allocation5 + $0x18] sm:$0xf]
    %v86 = vld [vmem:[#allocation5 + $0x1c] sm:$0xf]
    %v87 = vld [vmem:[#allocation5 + $0x20] sm:$0xf]
    %v88 = vld [vmem:[#allocation5 + $0x24] sm:$0xf]
    %v89 = vld [vmem:[#allocation5 + $0x28] sm:$0xf]
    %v90 = vld [vmem:[#allocation5 + $0x2c] sm:$0xf]
    %v91 = vld [vmem:[#allocation5 + $0x30] sm:$0xf]
    %v92 = vld [vmem:[#allocation5 + $0x34] sm:$0xf]
    %v93 = vld [vmem:[#allocation5 + $0x38] sm:$0xf]
    %v94 = vld [vmem:[#allocation5 + $0x3c] sm:$0xf]
    %v95 = vld [vmem:[%s2] sm:$0x1]
    %v97 = vperm.slane %v95, 0
    %v131 = vunpack.c.l.b16 %v47
    %v132 = vunpack.c.l.b16 %v48
    %v133 = vunpack.c.l.b16 %v49
    %v134 = vunpack.c.l.b16 %v50
    %v135 = vunpack.c.l.b16 %v51
    %v136 = vunpack.c.l.b16 %v52
    %v137 = vunpack.c.l.b16 %v53
    %v138 = vunpack.c.l.b16 %v54
    %v139 = vunpack.c.l.b16 %v55
    %v140 = vunpack.c.l.b16 %v56
    %v141 = vunpack.c.l.b16 %v57
    %v142 = vunpack.c.l.b16 %v58
    %v143 = vunpack.c.l.b16 %v59
    %v144 = vunpack.c.l.b16 %v60
    %v145 = vunpack.c.l.b16 %v61
    %v146 = vunpack.c.l.b16 %v62
    %v147 = vunpack.c.l.b16 %v63
    %v148 = vunpack.c.l.b16 %v64
    %v149 = vunpack.c.l.b16 %v65
    %v150 = vunpack.c.l.b16 %v66
    %v151 = vunpack.c.l.b16 %v67
    %v152 = vunpack.c.l.b16 %v68
    %v153 = vunpack.c.l.b16 %v69
    %v154 = vunpack.c.l.b16 %v70
    %v155 = vunpack.c.l.b16 %v71
    %v156 = vunpack.c.l.b16 %v72
    %v157 = vunpack.c.l.b16 %v73
    %v158 = vunpack.c.l.b16 %v74
    %v159 = vunpack.c.l.b16 %v75
    %v160 = vunpack.c.l.b16 %v76
    %v161 = vunpack.c.l.b16 %v77
    %v162 = vunpack.c.l.b16 %v78
    %v163 = vpack.c.b16 %v132, %v131
    %v164 = vpack.c.b16 %v134, %v133
    %v165 = vpack.c.b16 %v136, %v135
    %v166 = vpack.c.b16 %v138, %v137
    %v167 = vpack.c.b16 %v140, %v139
    %v168 = vpack.c.b16 %v142, %v141
    %v169 = vpack.c.b16 %v144, %v143
    %v170 = vpack.c.b16 %v146, %v145
    %v171 = vpack.c.b16 %v148, %v147
    %v172 = vpack.c.b16 %v150, %v149
    %v173 = vpack.c.b16 %v152, %v151
    %v174 = vpack.c.b16 %v154, %v153
    %v175 = vpack.c.b16 %v156, %v155
    %v176 = vpack.c.b16 %v158, %v157
    %v177 = vpack.c.b16 %v160, %v159
    %v178 = vpack.c.b16 %v162, %v161
    %v211 = vunpack.c.l.b16 %v79
    %v212 = vunpack.c.l.b16 %v80
    %v213 = vunpack.c.l.b16 %v81
    %v214 = vunpack.c.l.b16 %v82
    %v215 = vunpack.c.l.b16 %v83
    %v216 = vunpack.c.l.b16 %v84
    %v217 = vunpack.c.l.b16 %v85
    %v218 = vunpack.c.l.b16 %v86
    %v219 = vunpack.c.l.b16 %v87
    %v220 = vunpack.c.l.b16 %v88
    %v221 = vunpack.c.l.b16 %v89
    %v222 = vunpack.c.l.b16 %v90
    %v223 = vunpack.c.l.b16 %v91
    %v224 = vunpack.c.l.b16 %v92
    %v225 = vunpack.c.l.b16 %v93
    %v226 = vunpack.c.l.b16 %v94
    %v227 = vpack.c.b16 %v212, %v211
    %v228 = vpack.c.b16 %v214, %v213
    %v229 = vpack.c.b16 %v216, %v215
    %v230 = vpack.c.b16 %v218, %v217
    %v231 = vpack.c.b16 %v220, %v219
    %v232 = vpack.c.b16 %v222, %v221
    %v233 = vpack.c.b16 %v224, %v223
    %v234 = vpack.c.b16 %v226, %v225
    %243 = vmatpush.bf16.msra.mxu0 %v234
    %244 = vmatpush.bf16.msra.mxu0 %v233
    %245 = vmatpush.bf16.msra.mxu0 %v232
    %246 = vmatpush.bf16.msra.mxu0 %v231
    %247 = vmatpush.bf16.msra.mxu0 %v230
    %248 = vmatpush.bf16.msra.mxu0 %v229
    %249 = vmatpush.bf16.msra.mxu0 %v228
    %250 = vmatpush.bf16.msra.mxu0 %v227
    %251 = vmatmul.bf16.gmra.mxu0 %v163
    %v252 = vpop.f32.mrf.mxu0
    %v253 = vadd.f32 %v97, %v252
    %v254 = vpop.f32.mrf.mxu0
    %v255 = vadd.f32 %v97, %v254
    %256 = vmatmul.bf16.gmra.mxu0 %v164
    %v257 = vpop.f32.mrf.mxu0
    %v258 = vadd.f32 %v97, %v257
    %v259 = vpop.f32.mrf.mxu0
    %v260 = vadd.f32 %v97, %v259
    %261 = vmatmul.bf16.gmra.mxu0 %v165
    %v262 = vpop.f32.mrf.mxu0
    %v263 = vadd.f32 %v97, %v262
    %v264 = vpop.f32.mrf.mxu0
    %v265 = vadd.f32 %v97, %v264
    %266 = vmatmul.bf16.gmra.mxu0 %v166
    %v267 = vpop.f32.mrf.mxu0
    %v268 = vadd.f32 %v97, %v267
    %v269 = vpop.f32.mrf.mxu0
    %v270 = vadd.f32 %v97, %v269
    %271 = vmatmul.bf16.gmra.mxu0 %v167
    %v272 = vpop.f32.mrf.mxu0
    %v273 = vadd.f32 %v97, %v272
    %v274 = vpop.f32.mrf.mxu0
    %v275 = vadd.f32 %v97, %v274
    %276 = vmatmul.bf16.gmra.mxu0 %v168
    %v277 = vpop.f32.mrf.mxu0
    %v278 = vadd.f32 %v97, %v277
    %v279 = vpop.f32.mrf.mxu0
    %v280 = vadd.f32 %v97, %v279
    %281 = vmatmul.bf16.gmra.mxu0 %v169
    %v282 = vpop.f32.mrf.mxu0
    %v283 = vadd.f32 %v97, %v282
    %v284 = vpop.f32.mrf.mxu0
    %v285 = vadd.f32 %v97, %v284
    %286 = vmatmul.bf16.gmra.mxu0 %v170
    %v287 = vpop.f32.mrf.mxu0
    %v288 = vadd.f32 %v97, %v287
    %v289 = vpop.f32.mrf.mxu0
    %v290 = vadd.f32 %v97, %v289
    %291 = vmatmul.bf16.gmra.mxu0 %v171
    %v292 = vpop.f32.mrf.mxu0
    %v293 = vadd.f32 %v97, %v292
    %v294 = vpop.f32.mrf.mxu0
    %v295 = vadd.f32 %v97, %v294
    %296 = vmatmul.bf16.gmra.mxu0 %v172
    %v297 = vpop.f32.mrf.mxu0
    %v298 = vadd.f32 %v97, %v297
    %v299 = vpop.f32.mrf.mxu0
    %v300 = vadd.f32 %v97, %v299
    %301 = vmatmul.bf16.gmra.mxu0 %v173
    %v302 = vpop.f32.mrf.mxu0
    %v303 = vadd.f32 %v97, %v302
    %v304 = vpop.f32.mrf.mxu0
    %v305 = vadd.f32 %v97, %v304
    %306 = vmatmul.bf16.gmra.mxu0 %v174
    %v307 = vpop.f32.mrf.mxu0
    %v308 = vadd.f32 %v97, %v307
    %v309 = vpop.f32.mrf.mxu0
    %v310 = vadd.f32 %v97, %v309
    %311 = vmatmul.bf16.gmra.mxu0 %v175
    %v312 = vpop.f32.mrf.mxu0
    %v313 = vadd.f32 %v97, %v312
    %v314 = vpop.f32.mrf.mxu0
    %v315 = vadd.f32 %v97, %v314
    %316 = vmatmul.bf16.gmra.mxu0 %v176
    %v317 = vpop.f32.mrf.mxu0
    %v318 = vadd.f32 %v97, %v317
    %v319 = vpop.f32.mrf.mxu0
    %v320 = vadd.f32 %v97, %v319
    %321 = vmatmul.bf16.gmra.mxu0 %v177
    %v322 = vpop.f32.mrf.mxu0
    %v323 = vadd.f32 %v97, %v322
    %v324 = vpop.f32.mrf.mxu0
    %v325 = vadd.f32 %v97, %v324
    %326 = vmatmul.bf16.gmra.mxu0 %v178
    %v327 = vpop.f32.mrf.mxu0
    %v328 = vadd.f32 %v97, %v327
    %v329 = vpop.f32.mrf.mxu0
    %v330 = vadd.f32 %v97, %v329
    %331 = vdwg.mxu0
    %v332 = vtanh.pop %v253
    %v333 = vtanh.pop %v255
    %v334 = vtanh.pop %v258
    %v335 = vtanh.pop %v260
    %v336 = vtanh.pop %v263
    %v337 = vtanh.pop %v265
    %v338 = vtanh.pop %v268
    %v339 = vtanh.pop %v270
    %v340 = vtanh.pop %v273
    %v341 = vtanh.pop %v275
    %v342 = vtanh.pop %v278
    %v343 = vtanh.pop %v280
    %v344 = vtanh.pop %v283
    %v345 = vtanh.pop %v285
    %v346 = vtanh.pop %v288
    %v347 = vtanh.pop %v290
    %v348 = vtanh.pop %v293
    %v349 = vtanh.pop %v295
    %v350 = vtanh.pop %v298
    %v351 = vtanh.pop %v300
    %v352 = vtanh.pop %v303
    %v353 = vtanh.pop %v305
    %v354 = vtanh.pop %v308
    %v355 = vtanh.pop %v310
    %v356 = vtanh.pop %v313
    %v357 = vtanh.pop %v315
    %v358 = vtanh.pop %v318
    %v359 = vtanh.pop %v320
    %v360 = vtanh.pop %v323
    %v361 = vtanh.pop %v325
    %v362 = vtanh.pop %v328
    %v363 = vtanh.pop %v330
    %v364 = vadd.f32 %v332, %v333
    %v365 = vrot.slane %v364, 4
    %v366 = vadd.f32 %v364, %v365
    %v367 = vrot.slane %v366, 2
    %v368 = vadd.f32 %v366, %v367
    %v369 = vrot.slane %v368, 1
    %v370 = vadd.f32 %v368, %v369
    %v371 = vadd.f32 %v334, %v335
    %v372 = vrot.slane %v371, 4
    %v373 = vadd.f32 %v371, %v372
    %v374 = vrot.slane %v373, 2
    %v375 = vadd.f32 %v373, %v374
    %v376 = vrot.slane %v375, 1
    %v377 = vadd.f32 %v375, %v376
    %v378 = vadd.f32 %v336, %v337
    %v379 = vrot.slane %v378, 4
    %v380 = vadd.f32 %v378, %v379
    %v381 = vrot.slane %v380, 2
    %v382 = vadd.f32 %v380, %v381
    %v383 = vrot.slane %v382, 1
    %v384 = vadd.f32 %v382, %v383
    %v385 = vadd.f32 %v338, %v339
    %v386 = vrot.slane %v385, 4
    %v387 = vadd.f32 %v385, %v386
    %v388 = vrot.slane %v387, 2
    %v389 = vadd.f32 %v387, %v388
    %v390 = vrot.slane %v389, 1
    %v391 = vadd.f32 %v389, %v390
    %v392 = vadd.f32 %v340, %v341
    %v393 = vrot.slane %v392, 4
    %v394 = vadd.f32 %v392, %v393
    %v395 = vrot.slane %v394, 2
    %v396 = vadd.f32 %v394, %v395
    %v397 = vrot.slane %v396, 1
    %v398 = vadd.f32 %v396, %v397
    %v399 = vadd.f32 %v342, %v343
    %v400 = vrot.slane %v399, 4
    %v401 = vadd.f32 %v399, %v400
    %v402 = vrot.slane %v401, 2
    %v403 = vadd.f32 %v401, %v402
    %v404 = vrot.slane %v403, 1
    %v405 = vadd.f32 %v403, %v404
    %v406 = vadd.f32 %v344, %v345
    %v407 = vrot.slane %v406, 4
    %v408 = vadd.f32 %v406, %v407
    %v409 = vrot.slane %v408, 2
    %v410 = vadd.f32 %v408, %v409
    %v411 = vrot.slane %v410, 1
    %v412 = vadd.f32 %v410, %v411
    %v413 = vadd.f32 %v346, %v347
    %v414 = vrot.slane %v413, 4
    %v415 = vadd.f32 %v413, %v414
    %v416 = vrot.slane %v415, 2
    %v417 = vadd.f32 %v415, %v416
    %v418 = vrot.slane %v417, 1
    %v419 = vadd.f32 %v417, %v418
    %v420 = vadd.f32 %v348, %v349
    %v421 = vrot.slane %v420, 4
    %v422 = vadd.f32 %v420, %v421
    %v423 = vrot.slane %v422, 2
    %v424 = vadd.f32 %v422, %v423
    %v425 = vrot.slane %v424, 1
    %v426 = vadd.f32 %v424, %v425
    %v427 = vadd.f32 %v350, %v351
    %v428 = vrot.slane %v427, 4
    %v429 = vadd.f32 %v427, %v428
    %v430 = vrot.slane %v429, 2
    %v431 = vadd.f32 %v429, %v430
    %v432 = vrot.slane %v431, 1
    %v433 = vadd.f32 %v431, %v432
    %v434 = vadd.f32 %v352, %v353
    %v435 = vrot.slane %v434, 4
    %v436 = vadd.f32 %v434, %v435
    %v437 = vrot.slane %v436, 2
    %v438 = vadd.f32 %v436, %v437
    %v439 = vrot.slane %v438, 1
    %v440 = vadd.f32 %v438, %v439
    %v441 = vadd.f32 %v354, %v355
    %v442 = vrot.slane %v441, 4
    %v443 = vadd.f32 %v441, %v442
    %v444 = vrot.slane %v443, 2
    %v445 = vadd.f32 %v443, %v444
    %v446 = vrot.slane %v445, 1
    %v447 = vadd.f32 %v445, %v446
    %v448 = vadd.f32 %v356, %v357
    %v449 = vrot.slane %v448, 4
    %v450 = vadd.f32 %v448, %v449
    %v451 = vrot.slane %v450, 2
    %v452 = vadd.f32 %v450, %v451
    %v453 = vrot.slane %v452, 1
    %v454 = vadd.f32 %v452, %v453
    %v455 = vadd.f32 %v358, %v359
    %v456 = vrot.slane %v455, 4
    %v457 = vadd.f32 %v455, %v456
    %v458 = vrot.slane %v457, 2
    %v459 = vadd.f32 %v457, %v458
    %v460 = vrot.slane %v459, 1
    %v461 = vadd.f32 %v459, %v460
    %v462 = vadd.f32 %v360, %v361
    %v463 = vrot.slane %v462, 4
    %v464 = vadd.f32 %v462, %v463
    %v465 = vrot.slane %v464, 2
    %v466 = vadd.f32 %v464, %v465
    %v467 = vrot.slane %v466, 1
    %v468 = vadd.f32 %v466, %v467
    %v469 = vadd.f32 %v362, %v363
    %v470 = vrot.slane %v469, 4
    %v471 = vadd.f32 %v469, %v470
    %v472 = vrot.slane %v471, 2
    %v473 = vadd.f32 %v471, %v472
    %v474 = vrot.slane %v473, 1
    %v475 = vadd.f32 %v473, %v474
    %v476 = vmul.f32 %v370, 0.0625
    %v477 = vmul.f32 %v377, 0.0625
    %v478 = vmul.f32 %v384, 0.0625
    %v479 = vmul.f32 %v391, 0.0625
    %v480 = vmul.f32 %v398, 0.0625
    %v481 = vmul.f32 %v405, 0.0625
    %v482 = vmul.f32 %v412, 0.0625
    %v483 = vmul.f32 %v419, 0.0625
    %v484 = vmul.f32 %v426, 0.0625
    %v485 = vmul.f32 %v433, 0.0625
    %v486 = vmul.f32 %v440, 0.0625
    %v487 = vmul.f32 %v447, 0.0625
    %v488 = vmul.f32 %v454, 0.0625
    %v489 = vmul.f32 %v461, 0.0625
    %v490 = vmul.f32 %v468, 0.0625
    %v491 = vmul.f32 %v475, 0.0625
    %vm508 = vcmask 1041409
    %v509 = vsel %vm508, %v477, %v476
    %vm510 = vcmask 1042434
    %v511 = vsel %vm510, %v478, %v509
    %vm512 = vcmask 1043459
    %v513 = vsel %vm512, %v479, %v511
    %vm514 = vcmask 1044484
    %v515 = vsel %vm514, %v480, %v513
    %vm516 = vcmask 1045509
    %v517 = vsel %vm516, %v481, %v515
    %vm518 = vcmask 1046534
    %v519 = vsel %vm518, %v482, %v517
    %vm520 = vcmask 1047559
    %v521 = vsel %vm520, %v483, %v519
    %v522 = vsel %vm508, %v485, %v484
    %v523 = vsel %vm510, %v486, %v522
    %v524 = vsel %vm512, %v487, %v523
    %v525 = vsel %vm514, %v488, %v524
    %v526 = vsel %vm516, %v489, %v525
    %v527 = vsel %vm518, %v490, %v526
    %v528 = vsel %vm520, %v491, %v527
    %531 = vst [vmem:[#allocation7] sm:$0xff] %v521
    %532 = vst [vmem:[#allocation7 + $0x8] sm:$0xff] %v528
    // Predicated region
    $region22: #{tpu_custom_call.1} parent=1 // pred_check
      _
    $region23: #{tpu_custom_call.1} parent=1 // pred_check_branch
      %534 = sbr.rel (0) target = $region25
    $region24: #{tpu_custom_call.1} parent=1 // pred_region
      %536 = vsyncadd [#allocation4], 0
      %s537 = sshll.u32 [#allocation7], 4
      %s538 = int_to_ptr.vmem [resolvable:$true] %s537
      %s539 = sshll.u32 %s3, 4
      %s540 = int_to_ptr.hbm [resolvable:$true] %s539
      %545 = dma.vmem_to_hbm [thread:$0]  %s538, 256, %s540, [#allocation4], 128, 128, 8
    $region25: #{tpu_custom_call.1} parent=1 // pred_fallthru
      _
    // Predicated region
    $region26: #{tpu_custom_call.1} parent=1 // pred_check
      _
    $region27: #{tpu_custom_call.1} parent=1 // pred_check_branch
      %547 = sbr.rel (0) target = $region29
    $region28: #{tpu_custom_call.1} parent=1 // pred_region
      %549 = dma.done [#allocation4], 256
    $region29: #{tpu_custom_call.1} parent=1 // pred_fallthru
      _
    %550 = vsyncpa [#allocation3], 1
    %551 = vsyncpa [#allocation6], 1
    %552 = vsyncpa [#allocation4], 1

</llo_original>
